<compile_context>
chip_gen: v6e
topology: v6e:2x2x1
jax: 0.10.0
libtpu: 0.0.40
codegen_flags: <defaults>
</compile_context>

<pallas_src>
import numpy as np
import jax
import jax.numpy as jnp
from jax.experimental import pallas as pl
from jax.experimental.pallas import tpu as pltpu


def _pe3d_kernel(inv_freq_ref, yz_ref, s_sin_ref, s_cos_ref, o_ref):
    # Block shapes:
    #   inv_freq_ref : (1, HALF_P)    f32  inv_freq, zero-padded to HALF_P pairs
    #   yz_ref       : (Y, Z*C)       f32  x-invariant y/z segments (0 in x-seg)
    #   s_sin_ref    : (HALF_P, Z*C)  f32  0/1 scatter: pair p -> lane z*C + 2p
    #   s_cos_ref    : (HALF_P, Z*C)  f32  0/1 scatter: pair p -> lane z*C + 2p+1
    #   o_ref        : (TX, Y, Z*C)   output dtype (batch dim squeezed away)
    tx = o_ref.shape[0]
    half_p = inv_freq_ref.shape[1]

    # x positions covered by this block (grid = (B, X-blocks); x is axis 1).
    x0 = (pl.program_id(1) * tx).astype(jnp.float32)
    row = jax.lax.broadcasted_iota(jnp.int32, (tx, half_p), 0).astype(jnp.float32)
    ang = (x0 + row) * inv_freq_ref[...]                     # (TX, HALF_P)

    # Transcendentals only on the tiny (TX, HALF_P) tile.
    sin_x = jnp.sin(ang)
    cos_x = jnp.cos(ang)

    # Scatter interleaved (sin, cos) pairs into the lane-dense x segment of
    # every z position via two tiny constant matmuls (exact 0/1 weights, so
    # lanes outside the x segment are exactly 0).
    x_seg = (
        jnp.dot(sin_x, s_sin_ref[...], preferred_element_type=jnp.float32)
        + jnp.dot(cos_x, s_cos_ref[...], preferred_element_type=jnp.float32)
    )                                                        # (TX, Z*C)

    out = x_seg[:, None, :] + yz_ref[...][None, :, :]        # (TX, Y, Z*C)
    o_ref[...] = out.astype(o_ref.dtype)                     # direct, no reshape


def positional_encoding_3d(tensor):
    """Pallas equivalent of PositionalEncoding3D(ch).forward(tensor)."""
    B, X, Y, Z, orig_ch = tensor.shape
    channels = int(np.ceil(orig_ch / 6) * 2)
    if channels % 2:
        channels += 1
    half = channels // 2
    half_p = max(8, -(-half // 8) * 8)        # pad pair axis to a sublane multiple
    ZC = Z * orig_ch

    # inv_freq (same formula as the module), zero-padded to HALF_P pairs.
    inv_freq = 1.0 / (
        10000.0 ** (jnp.arange(0, channels, 2, dtype=jnp.float32) / channels)
    )
    inv_freq_in = jnp.zeros((1, half_p), jnp.float32).at[0, :half].set(inv_freq)

    # x-invariant y/z table, lane-dense (Y, Z*C); zeros in the x segment.
    def _get_emb(sin_inp):
        emb = jnp.stack([jnp.sin(sin_inp), jnp.cos(sin_inp)], axis=-1)
        return emb.reshape(sin_inp.shape[:-1] + (-1,))

    pos_y = jnp.arange(Y, dtype=jnp.float32)
    pos_z = jnp.arange(Z, dtype=jnp.float32)
    emb_y = _get_emb(pos_y[:, None] * inv_freq[None, :])      # (Y, channels)
    emb_z = _get_emb(pos_z[:, None] * inv_freq[None, :])      # (Z, channels)
    yz = jnp.zeros((Y, Z, 3 * channels), jnp.float32)
    yz = yz.at[:, :, channels:2 * channels].set(emb_y[:, None, :])
    yz = yz.at[:, :, 2 * channels:].set(emb_z[None, :, :])
    yz_table = yz[:, :, :orig_ch].reshape(Y, ZC)

    # Constant 0/1 scatter matrices: frequency pair p -> lanes z*C + 2p / 2p+1
    # (respecting the 3*channels -> orig_ch truncation).
    s_sin_np = np.zeros((half_p, ZC), np.float32)
    s_cos_np = np.zeros((half_p, ZC), np.float32)
    for p in range(half):
        for z in range(Z):
            if 2 * p < orig_ch:
                s_sin_np[p, z * orig_ch + 2 * p] = 1.0
            if 2 * p + 1 < orig_ch:
                s_cos_np[p, z * orig_ch + 2 * p + 1] = 1.0
    s_sin = jnp.asarray(s_sin_np)
    s_cos = jnp.asarray(s_cos_np)

    # X tiling: coarse, VMEM-budgeted blocks (~2 MiB each; double-buffered output
    # plus the f32 temp stays well under the 32 MiB scoped-VMEM default on v7x).
    # Only split X when B == 1 (batch already provides parallel grid steps).
    row_bytes = Y * ZC * max(jnp.dtype(tensor.dtype).itemsize, 4)
    tx = max(1, min(X, (2 * 1024 * 1024) // max(row_bytes, 1)))
    if B == 1 and X >= 2:
        tx = min(tx, -(-X // 2))
    grid_x = -(-X // tx)

    pe = pl.pallas_call(
        _pe3d_kernel,
        out_shape=jax.ShapeDtypeStruct((B, X, Y, ZC), tensor.dtype),
        grid=(B, grid_x),
        in_specs=[
            pl.BlockSpec((1, half_p), lambda b, i: (0, 0)),
            pl.BlockSpec((Y, ZC), lambda b, i: (0, 0)),
            pl.BlockSpec((half_p, ZC), lambda b, i: (0, 0)),
            pl.BlockSpec((half_p, ZC), lambda b, i: (0, 0)),
        ],
        # Batch dim squeezed from the kernel block; kernel writes (TX, Y, Z*C).
        out_specs=pl.BlockSpec((None, tx, Y, ZC), lambda b, i: (b, i, 0, 0)),
        compiler_params=pltpu.CompilerParams(
            dimension_semantics=("parallel", "parallel")),
    )(inv_freq_in, yz_table, s_sin, s_cos)

    # Free reshape of contiguous trailing dims; no extra broadcast pass needed.
    return pe.reshape(B, X, Y, Z, orig_ch)


def _reference_pe3d(tensor):
    """Pure-JAX reference mirroring the PyTorch module."""
    B, X, Y, Z, orig_ch = tensor.shape
    channels = int(np.ceil(orig_ch / 6) * 2)
    if channels % 2:
        channels += 1
    inv_freq = 1.0 / 10000 ** (
        jnp.arange(0, channels, 2, dtype=jnp.float32) / channels
    )

    def get_emb(sin_inp):
        emb = jnp.stack([jnp.sin(sin_inp), jnp.cos(sin_inp)], axis=-1)
        return emb.reshape(sin_inp.shape[:-1] + (-1,))

    pos_x = jnp.arange(X, dtype=jnp.float32)
    pos_y = jnp.arange(Y, dtype=jnp.float32)
    pos_z = jnp.arange(Z, dtype=jnp.float32)
    emb_x = get_emb(jnp.einsum("i,j->ij", pos_x, inv_freq))  # (X, channels)
    emb_y = get_emb(jnp.einsum("i,j->ij", pos_y, inv_freq))  # (Y, channels)
    emb_z = get_emb(jnp.einsum("i,j->ij", pos_z, inv_freq))  # (Z, channels)

    emb = jnp.zeros((X, Y, Z, channels * 3), dtype=tensor.dtype)
    emb = emb.at[..., :channels].set(emb_x[:, None, None, :].astype(tensor.dtype))
    emb = emb.at[..., channels:2 * channels].set(
        emb_y[None, :, None, :].astype(tensor.dtype)
    )
    emb = emb.at[..., 2 * channels:].set(
        emb_z[None, None, :, :].astype(tensor.dtype)
    )
    return jnp.broadcast_to(emb[None, ..., :orig_ch], (B, X, Y, Z, orig_ch))


if __name__ == "__main__":
    key = jax.random.PRNGKey(0)
    # (batch, x, y, z, ch) -- values of the input are irrelevant to the output,
    # matching the PyTorch module (only shape/dtype are used).
    test_shapes = [
        (2, 4, 5, 8, 16),   # Z*ch = 128 -> fully lane-dense stores
        (1, 3, 4, 6, 10),   # exercises channel truncation + partial X block
    ]
    for shape in test_shapes:
        x_in = jax.random.normal(key, shape, dtype=jnp.float32)
        out = jax.block_until_ready(positional_encoding_3d(x_in))
        ref = _reference_pe3d(x_in)
        np.testing.assert_allclose(
            np.asarray(out), np.asarray(ref), rtol=1e-5, atol=1e-5
        )
    print("KERNEL_OK")
</pallas_src>

<mosaic_0001>
module attributes {stable_mosaic.version = 11 : i64} {
  func.func @_pe3d_kernel(%arg0: i32, %arg1: i32, %arg2: memref<1x8xf32, #tpu.memory_space<vmem>>, %arg3: memref<5x128xf32, #tpu.memory_space<vmem>>, %arg4: memref<8x128xf32, #tpu.memory_space<vmem>>, %arg5: memref<8x128xf32, #tpu.memory_space<vmem>>, %arg6: memref<1x4x5x128xf32, #tpu.memory_space<vmem>>) attributes {dimension_semantics = [#tpu.dimension_semantics<parallel>, #tpu.dimension_semantics<parallel>], iteration_bounds = array<i64: 2, 1>, scalar_prefetch = 0 : i64, scratch_operands = 0 : i64, tpu.core_type = #tpu.core_type<tc>, window_params = [{pipeline_mode = #tpu.pipeline_mode<synchronous>, transform_indices = @transform_0, window_bounds = array<i64: 1, 8>}, {pipeline_mode = #tpu.pipeline_mode<synchronous>, transform_indices = @transform_1, window_bounds = array<i64: 5, 128>}, {pipeline_mode = #tpu.pipeline_mode<synchronous>, transform_indices = @transform_2, window_bounds = array<i64: 8, 128>}, {pipeline_mode = #tpu.pipeline_mode<synchronous>, transform_indices = @transform_3, window_bounds = array<i64: 8, 128>}, {transform_indices = @transform_4, window_bounds = array<i64: 1, 4, 5, 128>}]} {
    %c4_i32 = arith.constant 4 : i32
    %0 = arith.muli %arg1, %c4_i32 : i32
    %1 = arith.sitofp %0 : i32 to f32
    %2 = tpu.iota {dimensions = array<i32: 0>} : vector<4x8xi32>
    %3 = arith.sitofp %2 : vector<4x8xi32> to vector<4x8xf32>
    %4 = vector.broadcast %1 : f32 to vector<4x8xf32>
    %5 = arith.addf %4, %3 : vector<4x8xf32>
    %c0 = arith.constant 0 : index
    %c0_0 = arith.constant 0 : index
    %6 = vector.load %arg2[%c0, %c0_0] : memref<1x8xf32, #tpu.memory_space<vmem>>, vector<1x8xf32>
    %7 = vector.broadcast %6 : vector<1x8xf32> to vector<4x8xf32>
    %8 = arith.mulf %5, %7 : vector<4x8xf32>
    %9 = math.sin %8 : vector<4x8xf32>
    %10 = math.cos %8 : vector<4x8xf32>
    %c0_1 = arith.constant 0 : index
    %c0_2 = arith.constant 0 : index
    %11 = vector.load %arg4[%c0_1, %c0_2] : memref<8x128xf32, #tpu.memory_space<vmem>>, vector<8x128xf32>
    %cst = arith.constant dense<0.000000e+00> : vector<4x128xf32>
    %12 = tpu.matmul %9, %11, %cst {dimension_numbers = #tpu.dot_dimension_numbers<[1], [0], [0], [1], [0, 0, 1, 1], [], []>} : vector<4x8xf32>, vector<8x128xf32>, vector<4x128xf32> -> vector<4x128xf32>
    %c0_3 = arith.constant 0 : index
    %c0_4 = arith.constant 0 : index
    %13 = vector.load %arg5[%c0_3, %c0_4] : memref<8x128xf32, #tpu.memory_space<vmem>>, vector<8x128xf32>
    %cst_5 = arith.constant dense<0.000000e+00> : vector<4x128xf32>
    %14 = tpu.matmul %10, %13, %cst_5 {dimension_numbers = #tpu.dot_dimension_numbers<[1], [0], [0], [1], [0, 0, 1, 1], [], []>} : vector<4x8xf32>, vector<8x128xf32>, vector<4x128xf32> -> vector<4x128xf32>
    %15 = arith.addf %12, %14 : vector<4x128xf32>
    %16 = vector.shape_cast %15 : vector<4x128xf32> to vector<4x1x128xf32>
    %c0_6 = arith.constant 0 : index
    %c0_7 = arith.constant 0 : index
    %17 = vector.load %arg3[%c0_6, %c0_7] : memref<5x128xf32, #tpu.memory_space<vmem>>, vector<5x128xf32>
    %18 = vector.shape_cast %17 : vector<5x128xf32> to vector<1x5x128xf32>
    %19 = vector.broadcast %16 : vector<4x1x128xf32> to vector<4x5x128xf32>
    %20 = vector.broadcast %18 : vector<1x5x128xf32> to vector<4x5x128xf32>
    %21 = arith.addf %19, %20 : vector<4x5x128xf32>
    %c0_8 = arith.constant 0 : index
    %c0_9 = arith.constant 0 : index
    %c0_10 = arith.constant 0 : index
    %c0_11 = arith.constant 0 : index
    %22 = vector.load %arg6[%c0_8, %c0_9, %c0_10, %c0_11] : memref<1x4x5x128xf32, #tpu.memory_space<vmem>>, vector<1x4x5x128xf32>
    %23 = vector.shape_cast %22 : vector<1x4x5x128xf32> to vector<4x5x128xf32>
    %24 = vector.shape_cast %21 : vector<4x5x128xf32> to vector<1x4x5x128xf32>
    tpu.vector_store %arg6[%c0_8, %c0_9, %c0_10, %c0_11], %24 {strides = array<i32>} : memref<1x4x5x128xf32, #tpu.memory_space<vmem>>, vector<1x4x5x128xf32>,
    return
  }
  func.func @transform_0(%arg0: i32, %arg1: i32) -> (i32, i32) {
    %c0_i32 = arith.constant 0 : i32
    %c0_i32_0 = arith.constant 0 : i32
    %c0_i32_1 = arith.constant 0 : i32
    return %c0_i32, %c0_i32_0 : i32, i32
  }
  func.func @transform_1(%arg0: i32, %arg1: i32) -> (i32, i32) {
    %c0_i32 = arith.constant 0 : i32
    %c0_i32_0 = arith.constant 0 : i32
    %c0_i32_1 = arith.constant 0 : i32
    return %c0_i32, %c0_i32_0 : i32, i32
  }
  func.func @transform_2(%arg0: i32, %arg1: i32) -> (i32, i32) {
    %c0_i32 = arith.constant 0 : i32
    %c0_i32_0 = arith.constant 0 : i32
    %c0_i32_1 = arith.constant 0 : i32
    return %c0_i32, %c0_i32_0 : i32, i32
  }
  func.func @transform_3(%arg0: i32, %arg1: i32) -> (i32, i32) {
    %c0_i32 = arith.constant 0 : i32
    %c0_i32_0 = arith.constant 0 : i32
    %c0_i32_1 = arith.constant 0 : i32
    return %c0_i32, %c0_i32_0 : i32, i32
  }
  func.func @transform_4(%arg0: i32, %arg1: i32) -> (i32, i32, i32, i32) {
    %c0_i32 = arith.constant 0 : i32
    %c0_i32_0 = arith.constant 0 : i32
    %c0_i32_1 = arith.constant 0 : i32
    return %arg0, %arg1, %c0_i32, %c0_i32_0 : i32, i32, i32, i32
  }
}

</mosaic_0001>

<llo_original>
// kernel: tpu_custom_call.1
$region0: #{tpu_custom_call.1}
  #allocation0 [shape = 'u32[]', space=smem, size = 0x4, offset = 0x4, fixed_abs, tag = 'smem constant byte address 0x4 - core index']
  #allocation1 [shape = 'u32[144,128]{1,0:T(1,128)}', space=vmem, size = 0x12000, scoped, tag = 'internal scratch']
  %s0 = inlined_call_operand.hbm [shape: f32[1,8], index: 0, kind: input, shape index: {}]
  %s1 = inlined_call_operand.hbm [shape: f32[5,128], index: 1, kind: input, shape index: {}]
  %s2 = inlined_call_operand.hbm [shape: f32[8,128], index: 2, kind: input, shape index: {}]
  %s3 = inlined_call_operand.hbm [shape: f32[8,128], index: 3, kind: input, shape index: {}]
  %s4 = inlined_call_operand.vmem [shape: f32[2,4,5,128], index: 4, kind: output, shape index: {}]
  %s5 = sld [smem:[#allocation0]]
  $region65: #{tpu_custom_call.1} parent=0
    _
  %s7 = ssub.s32 1, %s5
  %s8 = scalar_select 0, %s7, %s5
  $region1: #{tpu_custom_call.1} parent=0
    #allocation2 [shape = 'u8[512]{0}', space=vmem, size = 0x400, scoped, tag = 'input window, operand 0, single buffered']
    #allocation3 [shape = 's32[2]{0}', space=sflag, size = 0x8, scoped, tag = 'scoped memory for tpu_custom_call.1']
    #allocation4 [shape = 'u8[4096]{0}', space=vmem, size = 0x1000, scoped, tag = 'input window, operand 1, single buffered']
    #allocation5 [shape = 's32[1]{0}', space=sflag, size = 0x4, scoped, tag = 'scoped memory for tpu_custom_call.1']
    #allocation6 [shape = 'u8[4096]{0}', space=vmem, size = 0x1000, scoped, tag = 'input window, operand 2, single buffered']
    #allocation7 [shape = 'u8[4096]{0}', space=vmem, size = 0x1000, scoped, tag = 'input window, operand 3, single buffered']
    #allocation8 [shape = 's32[1]{0}', space=sflag, size = 0x4, scoped, tag = 'scoped memory for tpu_custom_call.1']
    %9 = vsyncpa [#allocation3], 0
    %10 = vsyncpa [#allocation5], 0
    %11 = vsyncpa [#allocation8], 0
    loop: start=0, step=1, limit=4
    $region2: #{tpu_custom_call.1} parent=1 // loop_pre_header
      _
    $region3: #{tpu_custom_call.1} parent=1 // loop_header
      %s13 = sphi 0, %s17
      %p14 = scmp.ge.s32.totalorder %s13, 4
      %s20 = sphi 0, %s32
      %s21 = sphi 0, %s28
      %s22 = sphi 0, %s20
      %s23 = sphi 0, %s21
      %s24 = sphi 0, %s22
      %s25 = sphi 0, %s23
      %s33 = sphi 0, %s33
      %s35 = sphi 0, %s33
      %s36 = sphi 0, %s35
      %s50 = sphi 0, %s36
      %s54 = sphi 0, %s54
      %s56 = sphi 0, %s54
      %s57 = sphi 0, %s56
      %s71 = sphi 0, %s57
      %s75 = sphi 0, %s75
      %s77 = sphi 0, %s75
      %s78 = sphi 0, %s77
      %s92 = sphi 0, %s78
      %s96 = sphi 0, %s96
      %s98 = sphi 0, %s96
      %s99 = sphi 0, %s98
      %s113 = sphi 0, %s99
      %s121 = sphi 0, %s123
      %s124 = sphi 0, %s121
      %s125 = sphi 0, %s124
      %s141 = sphi 0, %s125
    $region4: #{tpu_custom_call.1} parent=1 // loop_header_branch
      %16 = sbr.rel (%p14) target = $region8
    $region5: #{tpu_custom_call.1} parent=1 // loop_body
      %s18 = ssub.s32 %s13, 1
      %s19 = ssub.s32 %s13, 2
      %s26 = sadd.s32 1, %s21
      %p27 = scmp.ge.s32.totalorder %s26, 1
      %s28 = scalar_select %p27, 0, %s26
      %s29 = sadd.s32 1, %s20
      %s30 = scalar_select %p27, %s29, %s20
      %p31 = scmp.ge.s32.totalorder %s30, 2
      %s32 = scalar_select %p31, 0, %s30
      %s34 = sadd.s32 %s33, 1
      %p37 = scmp.eq.s32.totalorder %s13, 1
      %p38 = scmp.ne.s32.totalorder %s33, %s35
      %p39 = scmp.eq.s32.totalorder %s13, 0
      %p40 = por %p38, %p39
      %p41 = scmp.ne.s32.totalorder %s33, %s35
      %p42 = scmp.eq.s32.totalorder %s18, 1
      %p43 = por %p41, %p42
      %p44 = scmp.ne.s32.totalorder %s35, %s36
      %p45 = scmp.eq.s32.totalorder %s18, 0
      %p46 = por %p44, %p45
      %p47 = scmp.ne.s32.totalorder %s35, %s36
      %p48 = scmp.eq.s32.totalorder %s19, 1
      %p49 = por %p47, %p48
      %p51 = scmp.ne.s32.totalorder %s36, %s50
      %p52 = scmp.eq.s32.totalorder %s19, 0
      %p53 = por %p51, %p52
      %s55 = sadd.s32 %s54, 1
      %p58 = scmp.eq.s32.totalorder %s13, 1
      %p59 = scmp.ne.s32.totalorder %s54, %s56
      %p60 = scmp.eq.s32.totalorder %s13, 0
      %p61 = por %p59, %p60
      %p62 = scmp.ne.s32.totalorder %s54, %s56
      %p63 = scmp.eq.s32.totalorder %s18, 1
      %p64 = por %p62, %p63
      %p65 = scmp.ne.s32.totalorder %s56, %s57
      %p66 = scmp.eq.s32.totalorder %s18, 0
      %p67 = por %p65, %p66
      %p68 = scmp.ne.s32.totalorder %s56, %s57
      %p69 = scmp.eq.s32.totalorder %s19, 1
      %p70 = por %p68, %p69
      %p72 = scmp.ne.s32.totalorder %s57, %s71
      %p73 = scmp.eq.s32.totalorder %s19, 0
      %p74 = por %p72, %p73
      %s76 = sadd.s32 %s75, 1
      %p79 = scmp.eq.s32.totalorder %s13, 1
      %p80 = scmp.ne.s32.totalorder %s75, %s77
      %p81 = scmp.eq.s32.totalorder %s13, 0
      %p82 = por %p80, %p81
      %p83 = scmp.ne.s32.totalorder %s75, %s77
      %p84 = scmp.eq.s32.totalorder %s18, 1
      %p85 = por %p83, %p84
      %p86 = scmp.ne.s32.totalorder %s77, %s78
      %p87 = scmp.eq.s32.totalorder %s18, 0
      %p88 = por %p86, %p87
      %p89 = scmp.ne.s32.totalorder %s77, %s78
      %p90 = scmp.eq.s32.totalorder %s19, 1
      %p91 = por %p89, %p90
      %p93 = scmp.ne.s32.totalorder %s78, %s92
      %p94 = scmp.eq.s32.totalorder %s19, 0
      %p95 = por %p93, %p94
      %s97 = sadd.s32 %s96, 1
      %p100 = scmp.eq.s32.totalorder %s13, 1
      %p101 = scmp.ne.s32.totalorder %s96, %s98
      %p102 = scmp.eq.s32.totalorder %s13, 0
      %p103 = por %p101, %p102
      %p104 = scmp.ne.s32.totalorder %s96, %s98
      %p105 = scmp.eq.s32.totalorder %s18, 1
      %p106 = por %p104, %p105
      %p107 = scmp.ne.s32.totalorder %s98, %s99
      %p108 = scmp.eq.s32.totalorder %s18, 0
      %p109 = por %p107, %p108
      %p110 = scmp.ne.s32.totalorder %s98, %s99
      %p111 = scmp.eq.s32.totalorder %s19, 1
      %p112 = por %p110, %p111
      %p114 = scmp.ne.s32.totalorder %s99, %s113
      %p115 = scmp.eq.s32.totalorder %s19, 0
      %p116 = por %p114, %p115
      %s117 = ssub.s32 %s20, %s32
      %s118 = ssub.s32 %s21, %s28
      %s119 = sor.u32 %s117, %s118
      %p120 = scmp.eq.s32.totalorder %s119, 0
      %s122 = sadd.s32 %s121, 1
      %s123 = scalar_select %p120, %s121, %s122
      %p126 = pneg %p120
      %p127 = scmp.eq.s32.totalorder %s13, 1
      %p128 = por %p126, %p127
      %p129 = scmp.ne.s32.totalorder %s121, %s124
      %p130 = scmp.eq.s32.totalorder %s13, 0
      %p131 = por %p129, %p130
      %p132 = scmp.ne.s32.totalorder %s121, %s124
      %p133 = scmp.eq.s32.totalorder %s18, 1
      %p134 = por %p132, %p133
      %p135 = scmp.ne.s32.totalorder %s124, %s125
      %p136 = scmp.eq.s32.totalorder %s18, 0
      %p137 = por %p135, %p136
      %p138 = scmp.ne.s32.totalorder %s124, %s125
      %p139 = scmp.eq.s32.totalorder %s19, 1
      %p140 = por %p138, %p139
      %p142 = scmp.ne.s32.totalorder %s125, %s141
      %p143 = scmp.eq.s32.totalorder %s19, 0
      %p144 = por %p142, %p143
      %p145 = scmp.le.s32.totalorder 1, %s13
      %p146 = scmp.lt.s32.totalorder %s13, 3
      %p147 = pnand %p145, %p146
      %p148 = pneg %p147
      // Predicated region
      $region9: #{tpu_custom_call.1} parent=5 // pred_check
        _
      $region10: #{tpu_custom_call.1} parent=5 // pred_check_branch
        %150 = sbr.rel (%p147) target = $region12
      $region11: #{tpu_custom_call.1} parent=5 // pred_region
        %s151 = ssub.s32 %s13, 1
        // Predicated region
        $region13: #{tpu_custom_call.1} parent=11 // pred_check
          %p152 = pneg %p46
        $region14: #{tpu_custom_call.1} parent=11 // pred_check_branch
          %154 = sbr.rel (%p152) target = $region16
        $region15: #{tpu_custom_call.1} parent=11 // pred_region
          %s156 = ssub.s32 16, 16
          %157 = vsyncadd [#allocation3], %s156
          %s159 = sshll.u32 [#allocation2], 4
          %s160 = int_to_ptr.vmem [resolvable:$true] %s159
          %162 = dma.hbm_to_vmem [thread:$0]  %s0, 16, %s160, [#allocation3]
        $region16: #{tpu_custom_call.1} parent=11 // pred_fallthru
          _
        // Predicated region
        $region17: #{tpu_custom_call.1} parent=11 // pred_check
          %p163 = pneg %p67
        $region18: #{tpu_custom_call.1} parent=11 // pred_check_branch
          %165 = sbr.rel (%p163) target = $region20
        $region19: #{tpu_custom_call.1} parent=11 // pred_region
          %s167 = ssub.s32 128, 128
          %168 = vsyncadd [#allocation5], %s167
          %s170 = sshll.u32 [#allocation4], 4
          %s171 = int_to_ptr.vmem [resolvable:$true] %s170
          %173 = dma.hbm_to_vmem [thread:$0]  %s1, 128, %s171, [#allocation5]
        $region20: #{tpu_custom_call.1} parent=11 // pred_fallthru
          _
        // Predicated region
        $region21: #{tpu_custom_call.1} parent=11 // pred_check
          %p174 = pneg %p88
        $region22: #{tpu_custom_call.1} parent=11 // pred_check_branch
          %176 = sbr.rel (%p174) target = $region24
        $region23: #{tpu_custom_call.1} parent=11 // pred_region
          %s178 = ssub.s32 128, 128
          %179 = vsyncadd [#allocation5], %s178
          %s181 = sshll.u32 [#allocation6], 4
          %s182 = int_to_ptr.vmem [resolvable:$true] %s181
          %184 = dma.hbm_to_vmem [thread:$0]  %s2, 128, %s182, [#allocation5]
        $region24: #{tpu_custom_call.1} parent=11 // pred_fallthru
          _
        // Predicated region
        $region25: #{tpu_custom_call.1} parent=11 // pred_check
          %p185 = pneg %p109
        $region26: #{tpu_custom_call.1} parent=11 // pred_check_branch
          %187 = sbr.rel (%p185) target = $region28
        $region27: #{tpu_custom_call.1} parent=11 // pred_region
          %s189 = ssub.s32 128, 128
          %190 = vsyncadd [#allocation8], %s189
          %s192 = sshll.u32 [#allocation7], 4
          %s193 = int_to_ptr.vmem [resolvable:$true] %s192
          %195 = dma.hbm_to_vmem [thread:$0]  %s3, 128, %s193, [#allocation8]
        $region28: #{tpu_custom_call.1} parent=11 // pred_fallthru
          _
      $region12: #{tpu_custom_call.1} parent=5 // pred_fallthru
        _
      %p196 = scmp.lt.s32.totalorder %s13, 2
      // Predicated region
      $region29: #{tpu_custom_call.1} parent=5 // pred_check
        %p197 = pneg %p196
      $region30: #{tpu_custom_call.1} parent=5 // pred_check_branch
        %199 = sbr.rel (%p197) target = $region32
      $region31: #{tpu_custom_call.1} parent=5 // pred_region
        _
      $region32: #{tpu_custom_call.1} parent=5 // pred_fallthru
        _
      %p200 = scmp.le.s32.totalorder 1, %s13
      %p201 = scmp.lt.s32.totalorder %s13, 3
      %p202 = pnand %p200, %p201
      %p203 = pneg %p202
      // Predicated region
      $region33: #{tpu_custom_call.1} parent=5 // pred_check
        _
      $region34: #{tpu_custom_call.1} parent=5 // pred_check_branch
        %205 = sbr.rel (%p202) target = $region36
      $region35: #{tpu_custom_call.1} parent=5 // pred_region
        %s206 = ssub.s32 %s13, 1
        // Predicated region
        $region37: #{tpu_custom_call.1} parent=35 // pred_check
          %p207 = pneg %p46
        $region38: #{tpu_custom_call.1} parent=35 // pred_check_branch
          %209 = sbr.rel (%p207) target = $region40
        $region39: #{tpu_custom_call.1} parent=35 // pred_region
          %210 = dma.done [#allocation3], 16
        $region40: #{tpu_custom_call.1} parent=35 // pred_fallthru
          _
        // Predicated region
        $region41: #{tpu_custom_call.1} parent=35 // pred_check
          %p211 = pneg %p67
        $region42: #{tpu_custom_call.1} parent=35 // pred_check_branch
          %213 = sbr.rel (%p211) target = $region44
        $region43: #{tpu_custom_call.1} parent=35 // pred_region
          %214 = dma.done [#allocation5], 128
        $region44: #{tpu_custom_call.1} parent=35 // pred_fallthru
          _
        // Predicated region
        $region45: #{tpu_custom_call.1} parent=35 // pred_check
          %p215 = pneg %p88
        $region46: #{tpu_custom_call.1} parent=35 // pred_check_branch
          %217 = sbr.rel (%p215) target = $region48
        $region47: #{tpu_custom_call.1} parent=35 // pred_region
          %218 = dma.done [#allocation5], 128
        $region48: #{tpu_custom_call.1} parent=35 // pred_fallthru
          _
        // Predicated region
        $region49: #{tpu_custom_call.1} parent=35 // pred_check
          %p219 = pneg %p109
        $region50: #{tpu_custom_call.1} parent=35 // pred_check_branch
          %221 = sbr.rel (%p219) target = $region52
        $region51: #{tpu_custom_call.1} parent=35 // pred_region
          %222 = dma.done [#allocation8], 128
        $region52: #{tpu_custom_call.1} parent=35 // pred_fallthru
          _
        %p223 = pneg %p46
        %p224 = pneg %p43
        %p225 = pneg %p67
        %p226 = pneg %p64
        %p227 = pneg %p88
        %p228 = pneg %p85
        %p229 = pneg %p109
        %p230 = pneg %p106
        %p231 = pneg %p137
        %p232 = pneg %p134
        %s233 = smul.u32 4, %s23
        %p234 = scmp.lt.s32.totalorder %s22, 1
        %s235 = scalar_select %p234, %s22, 1
        %p236 = scmp.lt.s32.totalorder %s233, 3
        %s237 = scalar_select %p236, %s233, 3
        %s238 = smul.addr %s235, 4
        %s239 = sadd.s32 %s237, %s238
        %s240 = smul.addr %s239, 8
        %s241 = scalar_lea.vmem %s4, %s240
        %s242 = smul.u32 4, %s23
        %p243 = scmp.lt.s32.totalorder %s22, 1
        %s244 = scalar_select %p243, %s22, 1
        %p245 = scmp.lt.s32.totalorder %s242, 3
        %s246 = scalar_select %p245, %s242, 3
        %s247 = smul.addr %s244, 4
        %s248 = sadd.s32 %s246, %s247
        %s249 = smul.addr %s248, 8
        %s250 = scalar_lea.vmem %s4, %s249
        %s251 = smul.u32 4, %s23
        %s252 = smul.u32 %s23, 4
        %s253 = scvt.s32.f32 %s252
        %v254 = vlaneseq
        %v255 = vshrl.u32 %v254, 7
        %v256 = vcvt.s32.f32 %v255
        %v257 = vstv %s253
        %v258 = vadd.f32 %v257, %v256
        %v259 = vld [vmem:[#allocation2] sm:$0x1]
        %v261 = vlaneseq
        %v262 = vshrl.u32 %v261, 7
        %v263 = vsub.s32 0, %v262
        %v264 = vrot.slane %v259, %v263
        %v266 = vmul.f32 %v258, %v264
        %v267 = vand.u32 2147483647, %v266
        %vm268 = vcmp.le.f32.partialorder %v267, 0.7853982
        %vm269 = vcmp.lt.s32.totalorder %v266, 0
        %v270 = vand.u32 %v266, 2139095040
        %v271 = vshrl.u32 %v270, 23
        %v272 = vsub.s32 %v271, 127
        %v273 = vand.u32 2147483647, %v266
        %v274 = vand.u32 %v273, 8388607
        %v275 = vor.u32 %v274, 8388608
        %v276 = vsub.s32 0, %v275
        %v277 = vadd.s32 %v272, 1
        %vm278 = vcmp.gt.s32.totalorder %v277, 0
        %v279 = vsel %vm278, %v277, 0
        %v280 = vshrl.u32 %v279, 5
        %v281 = vand.u32 %v279, 31
        %v282 = vsub.s32 32, %v281
        %v283 = vshrl.u32 683565275, %v282
        %v284 = vshll.u32 683565275, %v281
        %v285 = vshrl.u32 2475754826, %v282
        %v286 = vor.u32 %v284, %v285
        %v287 = vshll.u32 2475754826, %v281
        %v288 = vshrl.u32 2131351028, %v282
        %v289 = vor.u32 %v287, %v288
        %v290 = vshll.u32 2131351028, %v281
        %v291 = vshrl.u32 2102212464, %v282
        %v292 = vor.u32 %v290, %v291
        %v293 = vshll.u32 2102212464, %v281
        %v294 = vshrl.u32 920167782, %v282
        %v295 = vor.u32 %v293, %v294
        %v296 = vshll.u32 920167782, %v281
        %v297 = vshrl.u32 1326507024, %v282
        %v298 = vor.u32 %v296, %v297
        %vm299 = vcmp.lt.s32.totalorder %v280, 1
        %vm300 = vcmp.lt.s32.totalorder %v280, 2
        %vm301 = vcmp.lt.s32.totalorder %v280, 3
        %vm302 = vcmp.lt.s32.totalorder %v280, 4
        %v303 = vsel %vm299, %v283, %v286
        %v304 = vsel %vm302, %v292, 2102212464
        %v305 = vsel %vm301, %v289, %v304
        %v306 = vsel %vm300, %v303, %v305
        %v307 = vsel %vm299, %v286, %v289
        %v308 = vsel %vm302, %v295, 920167782
        %v309 = vsel %vm301, %v292, %v308
        %v310 = vsel %vm300, %v307, %v309
        %v311 = vsel %vm299, %v289, %v292
        %v312 = vsel %vm302, %v298, 1326507024
        %v313 = vsel %vm301, %v295, %v312
        %v314 = vsel %vm300, %v311, %v313
        %v315 = vshll.u32 %v275, 8
        %v316 = vmul.u32.u64.compose %v315, %v314
        %v317 = vextract.low.u32 %v316
        %v318 = vextract.high.u32 %v316
        %v319 = vmul.u32.u64.compose %v315, %v310
        %v320 = vextract.low.u32 %v319
        %v321 = vextract.high.u32 %v319
        %v322 = vmul.u32 %v315, %v306
        %v323 = vadd.s32 %v318, %v320
        %vm324 = vc.u32 %v318, %v320
        %v325 = vadd.s32 %v321, 1
        %v326 = vsel %vm324, %v325, %v321
        %v327 = vadd.s32 %v322, %v326
        %v328 = vadd.s32 %v327, 536870912
        %v329 = vshrl.u32 %v328, 30
        %v330 = vshll.u32 %v329, 30
        %v331 = vsub.s32 %v327, %v330
        %vm332 = vcmp.lt.s32.totalorder %v331, 0
        %v333 = vsub.s32 0, %v331
        %v334 = vsel %vm332, %v333, %v331
        %v335 = vclz %v334
        %v336 = vsub.s32 %v335, 2
        %vm337 = vcmp.gt.s32.totalorder 0, %v336
        %v338 = vsel %vm337, 0, %v336
        %v339 = vsub.s32 32, %v338
        %v340 = vshll.u32 %v331, %v338
        %v341 = vshrl.u32 %v323, %v339
        %v342 = vor.u32 %v340, %v341
        %v343 = vsub.s32 4294967266, %v338
        %v344 = vadd.s32 %v343, 127
        %v345 = vshll.u32 %v344, 23
        %v346 = vor.u32 4788187, %v345
        %v347 = vand.u32 2147483647, %v346
        %v349 = vcvt.s32.f32 %v342
        %v350 = vmul.f32 %v349, %v347
        %v351 = vxor.u32 %v350, 2147483648
        %v352 = vsel %vm269, %v351, %v350
        %v353 = vsub.s32 4, %v329
        %v354 = vsel %vm269, %v353, %v329
        %v355 = vsel %vm268, %v266, %v352
        %v356 = vsel %vm268, 0, %v354
        %v357 = vcosq.f32.pop %v355
        %v358 = vsinq.f32.pop %v355
        %vm359 = vweird.f32 %v266
        %v360 = vadd.s32 %v356, 3
        %v361 = vand.u32 %v360, 3
        %vm362 = vcmp.lt.s32.totalorder %v361, 2
        %vm363 = vcmp.eq.s32.totalorder %v361, 0
        %v364 = vxor.u32 %v358, 2147483648
        %v365 = vsel %vm363, %v357, %v364
        %vm366 = vcmp.eq.s32.totalorder %v361, 2
        %v367 = vxor.u32 %v357, 2147483648
        %v368 = vsel %vm366, %v367, %v358
        %v369 = vsel %vm362, %v365, %v368
        %v370 = vsel %vm359, nan, %v369
        %v371 = vand.u32 2147483647, %v266
        %vm372 = vcmp.le.f32.partialorder %v371, 0.7853982
        %vm373 = vcmp.lt.s32.totalorder %v266, 0
        %v374 = vand.u32 %v266, 2139095040
        %v375 = vshrl.u32 %v374, 23
        %v376 = vsub.s32 %v375, 127
        %v377 = vand.u32 2147483647, %v266
        %v378 = vand.u32 %v377, 8388607
        %v379 = vor.u32 %v378, 8388608
        %v380 = vsub.s32 0, %v379
        %v381 = vadd.s32 %v376, 1
        %vm382 = vcmp.gt.s32.totalorder %v381, 0
        %v383 = vsel %vm382, %v381, 0
        %v384 = vshrl.u32 %v383, 5
        %v385 = vand.u32 %v383, 31
        %v386 = vsub.s32 32, %v385
        %v387 = vshrl.u32 683565275, %v386
        %v388 = vshll.u32 683565275, %v385
        %v389 = vshrl.u32 2475754826, %v386
        %v390 = vor.u32 %v388, %v389
        %v391 = vshll.u32 2475754826, %v385
        %v392 = vshrl.u32 2131351028, %v386
        %v393 = vor.u32 %v391, %v392
        %v394 = vshll.u32 2131351028, %v385
        %v395 = vshrl.u32 2102212464, %v386
        %v396 = vor.u32 %v394, %v395
        %v397 = vshll.u32 2102212464, %v385
        %v398 = vshrl.u32 920167782, %v386
        %v399 = vor.u32 %v397, %v398
        %v400 = vshll.u32 920167782, %v385
        %v401 = vshrl.u32 1326507024, %v386
        %v402 = vor.u32 %v400, %v401
        %vm403 = vcmp.lt.s32.totalorder %v384, 1
        %vm404 = vcmp.lt.s32.totalorder %v384, 2
        %vm405 = vcmp.lt.s32.totalorder %v384, 3
        %vm406 = vcmp.lt.s32.totalorder %v384, 4
        %v407 = vsel %vm403, %v387, %v390
        %v408 = vsel %vm406, %v396, 2102212464
        %v409 = vsel %vm405, %v393, %v408
        %v410 = vsel %vm404, %v407, %v409
        %v411 = vsel %vm403, %v390, %v393
        %v412 = vsel %vm406, %v399, 920167782
        %v413 = vsel %vm405, %v396, %v412
        %v414 = vsel %vm404, %v411, %v413
        %v415 = vsel %vm403, %v393, %v396
        %v416 = vsel %vm406, %v402, 1326507024
        %v417 = vsel %vm405, %v399, %v416
        %v418 = vsel %vm404, %v415, %v417
        %v419 = vshll.u32 %v379, 8
        %v420 = vmul.u32.u64.compose %v419, %v418
        %v421 = vextract.low.u32 %v420
        %v422 = vextract.high.u32 %v420
        %v423 = vmul.u32.u64.compose %v419, %v414
        %v424 = vextract.low.u32 %v423
        %v425 = vextract.high.u32 %v423
        %v426 = vmul.u32 %v419, %v410
        %v427 = vadd.s32 %v422, %v424
        %vm428 = vc.u32 %v422, %v424
        %v429 = vadd.s32 %v425, 1
        %v430 = vsel %vm428, %v429, %v425
        %v431 = vadd.s32 %v426, %v430
        %v432 = vadd.s32 %v431, 536870912
        %v433 = vshrl.u32 %v432, 30
        %v434 = vshll.u32 %v433, 30
        %v435 = vsub.s32 %v431, %v434
        %vm436 = vcmp.lt.s32.totalorder %v435, 0
        %v437 = vsub.s32 0, %v435
        %v438 = vsel %vm436, %v437, %v435
        %v439 = vclz %v438
        %v440 = vsub.s32 %v439, 2
        %vm441 = vcmp.gt.s32.totalorder 0, %v440
        %v442 = vsel %vm441, 0, %v440
        %v443 = vsub.s32 32, %v442
        %v444 = vshll.u32 %v435, %v442
        %v445 = vshrl.u32 %v427, %v443
        %v446 = vor.u32 %v444, %v445
        %v447 = vsub.s32 4294967266, %v442
        %v448 = vadd.s32 %v447, 127
        %v449 = vshll.u32 %v448, 23
        %v450 = vor.u32 4788187, %v449
        %v451 = vand.u32 2147483647, %v450
        %v453 = vcvt.s32.f32 %v446
        %v454 = vmul.f32 %v453, %v451
        %v455 = vxor.u32 %v454, 2147483648
        %v456 = vsel %vm373, %v455, %v454
        %v457 = vsub.s32 4, %v433
        %v458 = vsel %vm373, %v457, %v433
        %v459 = vsel %vm372, %v266, %v456
        %v460 = vsel %vm372, 0, %v458
        %v461 = vcosq.f32.pop %v459
        %v462 = vsinq.f32.pop %v459
        %vm463 = vweird.f32 %v266
        %v464 = vand.u32 %v460, 3
        %vm465 = vcmp.lt.s32.totalorder %v464, 2
        %vm466 = vcmp.eq.s32.totalorder %v464, 0
        %v467 = vxor.u32 %v462, 2147483648
        %v468 = vsel %vm466, %v461, %v467
        %vm469 = vcmp.eq.s32.totalorder %v464, 2
        %v470 = vxor.u32 %v461, 2147483648
        %v471 = vsel %vm469, %v470, %v462
        %v472 = vsel %vm465, %v468, %v471
        %v473 = vsel %vm463, nan, %v472
        %v474 = vld [vmem:[#allocation6] sm:$0xff]
        %v475 = vld [vmem:[#allocation7] sm:$0xff]
        %vm476 = vcmask 64512
        %v478 = vsel %vm476, %v473, 0
        %480 = vmatprep.subr.mxu0 0.0
        %481 = vmatpush1.msra.mxu0 0.0
        %482 = vmatprep.subr.mxu0 0.0
        %483 = vmatpush1.msra.mxu0 0.0
        %484 = vmatprep.subr.mxu0 0.0
        %485 = vmatpush1.msra.mxu0 0.0
        %486 = vmatprep.subr.mxu0 0.0
        %487 = vmatpush1.msra.mxu0 0.0
        %488 = vmatprep.subr.mxu0 0.0
        %489 = vmatpush1.msra.mxu0 0.0
        %490 = vmatprep.subr.mxu0 0.0
        %491 = vmatpush1.msra.mxu0 0.0
        %492 = vmatprep.subr.mxu0 0.0
        %493 = vmatpush1.msra.mxu0 0.0
        %494 = vmatprep.subr.mxu0 0.0
        %495 = vmatpush1.msra.mxu0 0.0
        %496 = vmatprep.subr.mxu0 0.0
        %497 = vmatpush1.msra.mxu0 0.0
        %498 = vmatprep.subr.mxu0 0.0
        %499 = vmatpush1.msra.mxu0 0.0
        %500 = vmatprep.subr.mxu0 0.0
        %501 = vmatpush1.msra.mxu0 0.0
        %502 = vmatprep.subr.mxu0 0.0
        %503 = vmatpush1.msra.mxu0 0.0
        %504 = vmatprep.subr.mxu0 0.0
        %505 = vmatpush1.msra.mxu0 0.0
        %506 = vmatprep.subr.mxu0 0.0
        %507 = vmatpush1.msra.mxu0 0.0
        %508 = vmatprep.subr.mxu0 0.0
        %509 = vmatpush1.msra.mxu0 0.0
        %510 = vmatprep.subr.mxu0 0.0
        %511 = vmatpush1.msra.mxu0 %v475
        %512 = vmatprep.subr.mxu0 0.0
        %513 = vmatpush2.msra.mxu0 0.0
        %514 = vmatprep.subr.mxu0 0.0
        %515 = vmatpush2.msra.mxu0 0.0
        %516 = vmatprep.subr.mxu0 0.0
        %517 = vmatpush2.msra.mxu0 0.0
        %518 = vmatprep.subr.mxu0 0.0
        %519 = vmatpush2.msra.mxu0 0.0
        %520 = vmatprep.subr.mxu0 0.0
        %521 = vmatpush2.msra.mxu0 0.0
        %522 = vmatprep.subr.mxu0 0.0
        %523 = vmatpush2.msra.mxu0 0.0
        %524 = vmatprep.subr.mxu0 0.0
        %525 = vmatpush2.msra.mxu0 0.0
        %526 = vmatprep.subr.mxu0 0.0
        %527 = vmatpush2.msra.mxu0 0.0
        %528 = vmatprep.subr.mxu0 0.0
        %529 = vmatpush2.msra.mxu0 0.0
        %530 = vmatprep.subr.mxu0 0.0
        %531 = vmatpush2.msra.mxu0 0.0
        %532 = vmatprep.subr.mxu0 0.0
        %533 = vmatpush2.msra.mxu0 0.0
        %534 = vmatprep.subr.mxu0 0.0
        %535 = vmatpush2.msra.mxu0 0.0
        %536 = vmatprep.subr.mxu0 0.0
        %537 = vmatpush2.msra.mxu0 0.0
        %538 = vmatprep.subr.mxu0 0.0
        %539 = vmatpush2.msra.mxu0 0.0
        %540 = vmatprep.subr.mxu0 0.0
        %541 = vmatpush2.msra.mxu0 0.0
        %542 = vmatprep.subr.mxu0 0.0
        %543 = vmatpush2.msra.mxu0 0.0
        %544 = vmatprep.mubr.f32.mxu0 0.0
        %545 = vmatmul.mubr.f32.gmra.mxu0 %v478
        %v546 = vpop.f32.mrf.mxu0
        %v547 = vadd.f32 0.0, %v546
        %v548 = vpop.f32.mrf.mxu0
        %549 = vdwg.mxu0
        %v551 = vsel %vm476, %v370, 0
        %553 = vmatprep.subr.mxu0 0.0
        %554 = vmatpush1.msra.mxu0 0.0
        %555 = vmatprep.subr.mxu0 0.0
        %556 = vmatpush1.msra.mxu0 0.0
        %557 = vmatprep.subr.mxu0 0.0
        %558 = vmatpush1.msra.mxu0 0.0
        %559 = vmatprep.subr.mxu0 0.0
        %560 = vmatpush1.msra.mxu0 0.0
        %561 = vmatprep.subr.mxu0 0.0
        %562 = vmatpush1.msra.mxu0 0.0
        %563 = vmatprep.subr.mxu0 0.0
        %564 = vmatpush1.msra.mxu0 0.0
        %565 = vmatprep.subr.mxu0 0.0
        %566 = vmatpush1.msra.mxu0 0.0
        %567 = vmatprep.subr.mxu0 0.0
        %568 = vmatpush1.msra.mxu0 0.0
        %569 = vmatprep.subr.mxu0 0.0
        %570 = vmatpush1.msra.mxu0 0.0
        %571 = vmatprep.subr.mxu0 0.0
        %572 = vmatpush1.msra.mxu0 0.0
        %573 = vmatprep.subr.mxu0 0.0
        %574 = vmatpush1.msra.mxu0 0.0
        %575 = vmatprep.subr.mxu0 0.0
        %576 = vmatpush1.msra.mxu0 0.0
        %577 = vmatprep.subr.mxu0 0.0
        %578 = vmatpush1.msra.mxu0 0.0
        %579 = vmatprep.subr.mxu0 0.0
        %580 = vmatpush1.msra.mxu0 0.0
        %581 = vmatprep.subr.mxu0 0.0
        %582 = vmatpush1.msra.mxu0 0.0
        %583 = vmatprep.subr.mxu0 0.0
        %584 = vmatpush1.msra.mxu0 %v474
        %585 = vmatprep.subr.mxu0 0.0
        %586 = vmatpush2.msra.mxu0 0.0
        %587 = vmatprep.subr.mxu0 0.0
        %588 = vmatpush2.msra.mxu0 0.0
        %589 = vmatprep.subr.mxu0 0.0
        %590 = vmatpush2.msra.mxu0 0.0
        %591 = vmatprep.subr.mxu0 0.0
        %592 = vmatpush2.msra.mxu0 0.0
        %593 = vmatprep.subr.mxu0 0.0
        %594 = vmatpush2.msra.mxu0 0.0
        %595 = vmatprep.subr.mxu0 0.0
        %596 = vmatpush2.msra.mxu0 0.0
        %597 = vmatprep.subr.mxu0 0.0
        %598 = vmatpush2.msra.mxu0 0.0
        %599 = vmatprep.subr.mxu0 0.0
        %600 = vmatpush2.msra.mxu0 0.0
        %601 = vmatprep.subr.mxu0 0.0
        %602 = vmatpush2.msra.mxu0 0.0
        %603 = vmatprep.subr.mxu0 0.0
        %604 = vmatpush2.msra.mxu0 0.0
        %605 = vmatprep.subr.mxu0 0.0
        %606 = vmatpush2.msra.mxu0 0.0
        %607 = vmatprep.subr.mxu0 0.0
        %608 = vmatpush2.msra.mxu0 0.0
        %609 = vmatprep.subr.mxu0 0.0
        %610 = vmatpush2.msra.mxu0 0.0
        %611 = vmatprep.subr.mxu0 0.0
        %612 = vmatpush2.msra.mxu0 0.0
        %613 = vmatprep.subr.mxu0 0.0
        %614 = vmatpush2.msra.mxu0 0.0
        %615 = vmatprep.subr.mxu0 0.0
        %616 = vmatpush2.msra.mxu0 0.0
        %617 = vmatprep.mubr.f32.mxu0 0.0
        %618 = vmatmul.mubr.f32.gmra.mxu0 %v551
        %v619 = vpop.f32.mrf.mxu0
        %v620 = vadd.f32 %v547, %v619
        %v621 = vpop.f32.mrf.mxu0
        %622 = vdwg.mxu0
        %v625 = vunpack.c.l.s4 1966171168
        %v626 = vunpack.c.0.s8 %v625
        %v627 = vlaneseq
        %v628 = vshrl.u32 %v627, 7
        %v629 = vsub.s32 %v626, %v628
        %v630 = vrot.slane %v620, %v629
        %v631 = vcombine.high %v630, %v630
        %v633 = vunpack.c.l.s4 1966171168
        %v634 = vunpack.c.0.s8 %v633
        %v635 = vlaneseq
        %v636 = vshrl.u32 %v635, 7
        %v637 = vsub.s32 %v634, %v636
        %v638 = vrot.slane %v630, %v637
        %v640 = vunpack.c.l.s4 1966171168
        %v641 = vunpack.c.0.s8 %v640
        %v642 = vlaneseq
        %v643 = vshrl.u32 %v642, 7
        %v644 = vsub.s32 %v641, %v643
        %v645 = vrot.slane %v631, %v644
        %v646 = vcombine.high %v638, %v638
        %v647 = vcombine.high %v645, %v645
        %v648 = vld [vmem:[#allocation4] sm:$0x1f]
        %v649 = vlaneseq
        %v650 = vshrl.u32 %v649, 7
        %v651 = vsub.s32 0, %v650
        %v652 = vrot.slane %v638, %v651
        %v653 = vlaneseq
        %v654 = vshrl.u32 %v653, 7
        %v655 = vsub.s32 0, %v654
        %v656 = vrot.slane %v645, %v655
        %v657 = vlaneseq
        %v658 = vshrl.u32 %v657, 7
        %v659 = vsub.s32 0, %v658
        %v660 = vrot.slane %v646, %v659
        %v661 = vlaneseq
        %v662 = vshrl.u32 %v661, 7
        %v663 = vsub.s32 0, %v662
        %v664 = vrot.slane %v647, %v663
        %v669 = vadd.f32 %v652, %v648
        %v670 = vadd.f32 %v656, %v648
        %v671 = vadd.f32 %v660, %v648
        %v672 = vadd.f32 %v664, %v648
        %673 = vst [vmem:[%s250] sm:$0x1f] %v669
        %674 = vst [vmem:[%s250 + $0x8] sm:$0x1f] %v670
        %675 = vst [vmem:[%s250 + $0x10] sm:$0x1f] %v671
        %676 = vst [vmem:[%s250 + $0x18] sm:$0x1f] %v672
        %s677 = smul.u32 4, %s23
        %p678 = scmp.lt.s32.totalorder %s22, 1
        %s679 = scalar_select %p678, %s22, 1
        %p680 = scmp.lt.s32.totalorder %s677, 3
        %s681 = scalar_select %p680, %s677, 3
        %s682 = smul.addr %s679, 4
        %s683 = sadd.s32 %s681, %s682
        %s684 = smul.addr %s683, 8
        %s685 = scalar_lea.vmem %s4, %s684
        // Predicated region
        $region53: #{tpu_custom_call.1} parent=35 // pred_check
          %p686 = pneg %p134
        $region54: #{tpu_custom_call.1} parent=35 // pred_check_branch
          %688 = sbr.rel (%p686) target = $region56
        $region55: #{tpu_custom_call.1} parent=35 // pred_region
          %s689 = smul.u32 4, %s23
        $region56: #{tpu_custom_call.1} parent=35 // pred_fallthru
          _
      $region36: #{tpu_custom_call.1} parent=5 // pred_fallthru
        _
      %p690 = scmp.le.s32.totalorder 2, %s13
      // Predicated region
      $region57: #{tpu_custom_call.1} parent=5 // pred_check
        %p691 = pneg %p690
      $region58: #{tpu_custom_call.1} parent=5 // pred_check_branch
        %693 = sbr.rel (%p691) target = $region60
      $region59: #{tpu_custom_call.1} parent=5 // pred_region
        %s694 = ssub.s32 %s13, 2
        // Predicated region
        $region61: #{tpu_custom_call.1} parent=59 // pred_check
          %p695 = pneg %p140
        $region62: #{tpu_custom_call.1} parent=59 // pred_check_branch
          %697 = sbr.rel (%p695) target = $region64
        $region63: #{tpu_custom_call.1} parent=59 // pred_region
          %s698 = smul.u32 4, %s25
          %p699 = scmp.lt.s32.totalorder %s24, 1
          %s700 = scalar_select %p699, %s24, 1
          %p701 = scmp.lt.s32.totalorder %s698, 3
          %s702 = scalar_select %p701, %s698, 3
          %s703 = smul.addr %s700, 4
          %s704 = sadd.s32 %s702, %s703
          %s705 = smul.addr %s704, 8
          %s706 = scalar_lea.vmem %s4, %s705
        $region64: #{tpu_custom_call.1} parent=59 // pred_fallthru
          _
      $region60: #{tpu_custom_call.1} parent=5 // pred_fallthru
        _
    $region6: #{tpu_custom_call.1} parent=1 // loop_footer
      %s17 = sadd.s32 1, %s13
    $region7: #{tpu_custom_call.1} parent=1 // loop_footer_branch
      %12 = sbr.rel target = $region3
    $region8: #{tpu_custom_call.1} parent=1 // loop_exit
      _
    %707 = vsyncpa [#allocation3], 1
    %s708 = scalar_lea.sflag [#allocation3], 1
    %709 = vsyncpa %s708, 1
    %710 = vsyncpa [#allocation5], 1
    %711 = vsyncpa [#allocation8], 1

</llo_original>
